<compile_context>
chip_gen: v5e
topology: v5e:2x2
jax: 0.10.0
libtpu: 0.0.40
codegen_flags: <defaults>
</compile_context>

<pallas_src>
import jax
import jax.numpy as jnp
from jax.experimental import pallas as pl
from jax.experimental.pallas import tpu as pltpu

_LANE_CANDIDATES = (1024, 512, 256, 128)  # lane-dense last-dim widths
_TARGET_TILE_BYTES = 4 << 20              # ~4 MiB per tile buffer
_VMEM_LIMIT_BYTES = 32 << 20              # safe on v5e/v6e/v7x


def _round_up(n: int, m: int) -> int:
    return ((n + m - 1) // m) * m


def _ptmodule_kernel(x_ref, o_ref):
    x = x_ref[...]
    t = ((x + 2.0) * 3.0 - 1.0) * 0.5   # * 0.5 is exactly / 2
    o_ref[...] = t * t


def ptmodule_forward(x: jax.Array) -> jax.Array:
    """Pallas TPU implementation of PtModule.forward (any shape / float dtype)."""
    orig_shape = x.shape
    dtype = x.dtype
    total = x.size
    if total == 0:
        return x

    itemsize = x.dtype.itemsize
    sublane = max(8, 32 // itemsize)  # 8 for f32, 16 for bf16/f16, 32 for int8/fp8

    # Pick a lane-dense column width that divides the flattened size exactly
    # (no pad / slice HBM passes in the common case).
    lanes = None
    for cand in _LANE_CANDIDATES:
        if total % cand == 0:
            lanes = cand
            break

    pad = 0
    if lanes is None:
        # TODO(synk): handle sub-128 tails in-kernel with masked stores instead of pad+slice.
        lanes = 128
        pad = _round_up(total, lanes) - total

    flat = x.reshape(-1)
    if pad:
        flat = jnp.pad(flat, (0, pad))
    rows = flat.size // lanes
    x2d = flat.reshape(rows, lanes)

    # Tile sizing: ~_TARGET_TILE_BYTES per buffer, sublane-aligned rows,
    # and at least 2 grid steps when the input is large enough (v7x megacore).
    tile_rows = max(sublane,
                    (_TARGET_TILE_BYTES // (lanes * itemsize)) // sublane * sublane)
    if rows > 2 * sublane:
        tile_rows = min(tile_rows, _round_up(pl.cdiv(rows, 2), sublane))
    if tile_rows >= rows:
        tile_rows = rows  # single block covering the full row dim (allowed)
    grid = pl.cdiv(rows, tile_rows)

    out2d = pl.pallas_call(
        _ptmodule_kernel,
        out_shape=jax.ShapeDtypeStruct((rows, lanes), dtype),
        grid=(grid,),
        in_specs=[pl.BlockSpec((tile_rows, lanes), lambda i: (i, 0))],
        out_specs=pl.BlockSpec((tile_rows, lanes), lambda i: (i, 0)),
        compiler_params=pltpu.CompilerParams(
            dimension_semantics=("parallel",),
            vmem_limit_bytes=_VMEM_LIMIT_BYTES,
        ),
    )(x2d)

    out_flat = out2d.reshape(-1)
    if pad:
        out_flat = out_flat[:total]
    return out_flat.reshape(orig_shape)


def ptmodule_reference(x: jax.Array) -> jax.Array:
    out = x + 2.0
    out = out * 3.0
    out = out - 1.0
    out = out / 2.0
    return out ** 2


if __name__ == "__main__":
    key = jax.random.PRNGKey(0)
    x = jax.random.normal(key, (2, 4, 16, 16), dtype=jnp.float32)

    y = ptmodule_forward(x)
    jax.block_until_ready(y)

    y_ref = ptmodule_reference(x)
    assert y.shape == x.shape and y.dtype == x.dtype
    assert jnp.allclose(y, y_ref, rtol=1e-5, atol=1e-5)

    print("KERNEL_OK")
</pallas_src>

<mosaic_0001>
module attributes {stable_mosaic.version = 11 : i64} {
  func.func @_ptmodule_kernel(%arg0: i32, %arg1: memref<2x1024xf32, #tpu.memory_space<vmem>>, %arg2: memref<2x1024xf32, #tpu.memory_space<vmem>>) attributes {dimension_semantics = [#tpu.dimension_semantics<parallel>], iteration_bounds = array<i64: 1>, scalar_prefetch = 0 : i64, scratch_operands = 0 : i64, tpu.core_type = #tpu.core_type<tc>, window_params = [{transform_indices = @transform_0, window_bounds = array<i64: 2, 1024>}, {transform_indices = @transform_1, window_bounds = array<i64: 2, 1024>}]} {
    %c0 = arith.constant 0 : index
    %c0_0 = arith.constant 0 : index
    %0 = vector.load %arg1[%c0, %c0_0] : memref<2x1024xf32, #tpu.memory_space<vmem>>, vector<2x1024xf32>
    %cst = arith.constant 2.000000e+00 : f32
    %1 = vector.broadcast %cst : f32 to vector<2x1024xf32>
    %2 = arith.addf %0, %1 : vector<2x1024xf32>
    %cst_1 = arith.constant 3.000000e+00 : f32
    %3 = vector.broadcast %cst_1 : f32 to vector<2x1024xf32>
    %4 = arith.mulf %2, %3 : vector<2x1024xf32>
    %cst_2 = arith.constant 1.000000e+00 : f32
    %5 = vector.broadcast %cst_2 : f32 to vector<2x1024xf32>
    %6 = arith.subf %4, %5 : vector<2x1024xf32>
    %cst_3 = arith.constant 5.000000e-01 : f32
    %7 = vector.broadcast %cst_3 : f32 to vector<2x1024xf32>
    %8 = arith.mulf %6, %7 : vector<2x1024xf32>
    %9 = arith.mulf %8, %8 : vector<2x1024xf32>
    %c0_4 = arith.constant 0 : index
    %c0_5 = arith.constant 0 : index
    %10 = vector.load %arg2[%c0_4, %c0_5] : memref<2x1024xf32, #tpu.memory_space<vmem>>, vector<2x1024xf32>
    tpu.vector_store %arg2[%c0_4, %c0_5], %9 {strides = array<i32>} : memref<2x1024xf32, #tpu.memory_space<vmem>>, vector<2x1024xf32>,
    return
  }
  func.func @transform_0(%arg0: i32) -> (i32, i32) {
    %c0_i32 = arith.constant 0 : i32
    %c0_i32_0 = arith.constant 0 : i32
    return %arg0, %c0_i32 : i32, i32
  }
  func.func @transform_1(%arg0: i32) -> (i32, i32) {
    %c0_i32 = arith.constant 0 : i32
    %c0_i32_0 = arith.constant 0 : i32
    return %arg0, %c0_i32 : i32, i32
  }
}

</mosaic_0001>

<llo_original>
// kernel: tpu_custom_call.1
$region0: #{tpu_custom_call.1}
  #allocation0 [shape = 'u32[]', space=smem, size = 0x4, offset = 0x4, fixed_abs, tag = 'smem constant byte address 0x4 - core index']
  #allocation1 [shape = 'u32[72,128]{1,0:T(1,128)}', space=vmem, size = 0x9000, scoped, tag = 'internal scratch']
  %s0 = inlined_call_operand.hbm [shape: f32[2,1024], index: 0, kind: input, shape index: {}]
  %s1 = inlined_call_operand.hbm [shape: f32[2,1024], index: 1, kind: output, shape index: {}]
  %s2 = sld [smem:[#allocation0]]
  $region18: #{tpu_custom_call.1} parent=0
    _
  %s4 = ssub.s32 1, %s2
  %s5 = scalar_select 0, %s4, %s2
  $region1: #{tpu_custom_call.1} parent=0
    #allocation2 [shape = 'u8[8192]{0}', space=vmem, size = 0x2000, scoped, tag = 'input window, operand 0, single buffered']
    #allocation3 [shape = 's32[1]{0}', space=sflag, size = 0x4, scoped, tag = 'scoped memory for tpu_custom_call.1']
    #allocation4 [shape = 's32[1]{0}', space=sflag, size = 0x4, scoped, tag = 'scoped memory for tpu_custom_call.1']
    #allocation5 [shape = 'u8[8192]{0}', space=vmem, size = 0x2000, scoped, tag = 'output window, operand 0, single buffered']
    %6 = vsyncpa [#allocation3], 0
    %7 = vsyncpa [#allocation4], 0
    // Predicated region
    $region2: #{tpu_custom_call.1} parent=1 // pred_check
      _
    $region3: #{tpu_custom_call.1} parent=1 // pred_check_branch
      %9 = sbr.rel (0) target = $region5
    $region4: #{tpu_custom_call.1} parent=1 // pred_region
      %11 = vsyncadd [#allocation3], 0
      %s13 = sshll.u32 %s0, 4
      %s14 = int_to_ptr.hbm [resolvable:$true] %s13
      %s15 = sshll.u32 [#allocation2], 4
      %s16 = int_to_ptr.vmem [resolvable:$true] %s15
      %18 = dma.hbm_to_vmem [thread:$0]  %s14, 256, %s16, [#allocation3]
    $region5: #{tpu_custom_call.1} parent=1 // pred_fallthru
      _
    // Predicated region
    $region6: #{tpu_custom_call.1} parent=1 // pred_check
      _
    $region7: #{tpu_custom_call.1} parent=1 // pred_check_branch
      %20 = sbr.rel (0) target = $region9
    $region8: #{tpu_custom_call.1} parent=1 // pred_region
      %22 = dma.done [#allocation3], 256
    $region9: #{tpu_custom_call.1} parent=1 // pred_fallthru
      _
    %v23 = vld [vmem:[#allocation2] sm:$0xff]
    %v24 = vld [vmem:[#allocation2 + $0x8] sm:$0xff]
    %v25 = vadd.f32 %v23, 2.0
    %v26 = vadd.f32 %v24, 2.0
    %v27 = vmul.f32 %v25, 3.0
    %v28 = vmul.f32 %v26, 3.0
    %v29 = vsub.f32 %v27, 1.0
    %v30 = vsub.f32 %v28, 1.0
    %v31 = vmul.f32 %v29, 0.5
    %v32 = vmul.f32 %v30, 0.5
    %v33 = vmul.f32 %v31, %v31
    %v34 = vmul.f32 %v32, %v32
    %35 = vst [vmem:[#allocation5] sm:$0xff] %v33
    %36 = vst [vmem:[#allocation5 + $0x8] sm:$0xff] %v34
    // Predicated region
    $region10: #{tpu_custom_call.1} parent=1 // pred_check
      _
    $region11: #{tpu_custom_call.1} parent=1 // pred_check_branch
      %38 = sbr.rel (0) target = $region13
    $region12: #{tpu_custom_call.1} parent=1 // pred_region
      %40 = vsyncadd [#allocation4], 0
      %s42 = sshll.u32 [#allocation5], 4
      %s43 = int_to_ptr.vmem [resolvable:$true] %s42
      %s44 = sshll.u32 %s1, 4
      %s45 = int_to_ptr.hbm [resolvable:$true] %s44
      %47 = dma.vmem_to_hbm [thread:$0]  %s43, 256, %s45, [#allocation4]
    $region13: #{tpu_custom_call.1} parent=1 // pred_fallthru
      _
    // Predicated region
    $region14: #{tpu_custom_call.1} parent=1 // pred_check
      _
    $region15: #{tpu_custom_call.1} parent=1 // pred_check_branch
      %49 = sbr.rel (0) target = $region17
    $region16: #{tpu_custom_call.1} parent=1 // pred_region
      %51 = dma.done [#allocation4], 256
    $region17: #{tpu_custom_call.1} parent=1 // pred_fallthru
      _
    %52 = vsyncpa [#allocation3], 1
    %53 = vsyncpa [#allocation4], 1

</llo_original>
